<compile_context>
chip_gen: v7x
topology: tpu7x:2x2x1
jax: 0.10.0
libtpu: 0.0.40
codegen_flags: <defaults>
</compile_context>

<pallas_src>
import functools
import math

import jax
import jax.numpy as jnp
from jax import lax
from jax.experimental import pallas as pl
from jax.experimental.pallas import tpu as pltpu

_VMEM_LIMIT_BYTES = 32 * 1024 * 1024   # safe on v5e/v6e (128 MiB) and v7x (64 MiB)


def _round_up(x, m):
    return (x + m - 1) // m * m


# ---------------------------------------------------------------------------
# Kernel 1: QKV projection + head split; softmax scale folded into q.
# ---------------------------------------------------------------------------
def _qkv_proj_kernel(x_ref, w_ref, q_ref, k_ref, v_ref, *,
                     heads, dim_head, scale, compute_dtype):
    # x_ref: (1, block_n, D_pad); w_ref: (D_pad, 3*inner) (resident, invariant)
    x = x_ref[0].astype(compute_dtype)
    w = w_ref[...].astype(compute_dtype)
    proj = jnp.dot(x, w, preferred_element_type=jnp.float32)     # (bn, 3*inner)
    inner = heads * dim_head
    # Small static loop over heads: plain 2-D column slices + direct stores so
    # the attention kernel receives head-major tiles with no in-kernel
    # transpose/concat.  Scale is applied once here.
    for h in range(heads):
        lo = h * dim_head
        q_ref[0, h] = (proj[:, lo:lo + dim_head] * scale).astype(q_ref.dtype)
        k_ref[0, h] = proj[:, inner + lo:inner + lo + dim_head].astype(k_ref.dtype)
        v_ref[0, h] = proj[:, 2 * inner + lo:2 * inner + lo + dim_head].astype(v_ref.dtype)


# ---------------------------------------------------------------------------
# Shared epilogue: 'b h n d -> b n (h d)' + output projection (+ bias).
# ---------------------------------------------------------------------------
def _finalize_output(out, w_out_ref, b_out_ref, o_ref, *,
                     heads, project_out, compute_dtype):
    if project_out:
        bq = out.shape[1]
        d_out = w_out_ref.shape[-1]
        # sum_h out_h @ W_out[h]  ==  concat_h(out_h) @ W_out
        res = jnp.zeros((bq, d_out), jnp.float32)
        for h in range(heads):          # static epilogue loop; clean 2-D dots
            res = res + jnp.dot(out[h].astype(compute_dtype),
                                w_out_ref[h].astype(compute_dtype),
                                preferred_element_type=jnp.float32)
        res = res + b_out_ref[...]      # (1, d_out) broadcast
        o_ref[0] = res.astype(o_ref.dtype)
    else:
        # project_out is False only when heads == 1 (to_out = Identity).
        o_ref[0] = out[0].astype(o_ref.dtype)


# ---------------------------------------------------------------------------
# Kernel 2a: single-pass attention (whole KV range fits in one tile).
# No scratch, no online-softmax correction terms.
# ---------------------------------------------------------------------------
def _attn_single_kernel(*refs, heads, seq_len, needs_mask, project_out,
                        compute_dtype):
    if project_out:
        q_ref, k_ref, v_ref, w_out_ref, b_out_ref, o_ref = refs
    else:
        q_ref, k_ref, v_ref, o_ref = refs
        w_out_ref = b_out_ref = None

    q = q_ref[0]                        # (heads, bq, dh) -- already scaled
    k = k_ref[0]                        # (heads, n_kv, dh)
    v = v_ref[0]                        # (heads, n_kv, dh)

    s = jnp.einsum('hqd,hkd->hqk', q, k,
                   preferred_element_type=jnp.float32)            # (h, bq, n_kv)
    if needs_mask:
        kv_pos = lax.broadcasted_iota(jnp.int32, s.shape, 2)
        s = jnp.where(kv_pos < seq_len, s, -1e30)

    m = s.max(axis=-1, keepdims=True)
    p = jnp.exp(s - m)
    l = p.sum(axis=-1, keepdims=True)
    out = jnp.einsum('hqk,hkd->hqd', p.astype(compute_dtype), v,
                     preferred_element_type=jnp.float32)          # (h, bq, dh)
    out = out * pl.reciprocal(l, approx=True)                     # EUP, ~free
    _finalize_output(out, w_out_ref, b_out_ref, o_ref,
                     heads=heads, project_out=project_out,
                     compute_dtype=compute_dtype)


# ---------------------------------------------------------------------------
# Kernel 2b: flash attention (online softmax over KV tiles) with the output
# projection (+ bias) fused into the finalize step.
# ---------------------------------------------------------------------------
def _flash_attn_kernel(*refs, heads, seq_len, block_kv, needs_mask,
                       project_out, compute_dtype):
    if project_out:
        (q_ref, k_ref, v_ref, w_out_ref, b_out_ref, o_ref,
         m_s, l_s, acc_s) = refs
    else:
        q_ref, k_ref, v_ref, o_ref, m_s, l_s, acc_s = refs
        w_out_ref = b_out_ref = None

    ki = pl.program_id(2)

    @pl.when(ki == 0)
    def _init():
        m_s[...] = jnp.full(m_s.shape, -jnp.inf, dtype=m_s.dtype)
        l_s[...] = jnp.zeros(l_s.shape, dtype=l_s.dtype)
        acc_s[...] = jnp.zeros(acc_s.shape, dtype=acc_s.dtype)

    q = q_ref[0]                       # (heads, bq, dh) -- already scaled
    k = k_ref[0]                       # (heads, bkv, dh)
    v = v_ref[0]                       # (heads, bkv, dh)

    # Heads batched through one dot_general; contraction on the trailing dh
    # axis of both operands (no explicit transpose).
    s = jnp.einsum('hqd,hkd->hqk', q, k,
                   preferred_element_type=jnp.float32)           # (h, bq, bkv)

    if needs_mask:
        kv_pos = ki * block_kv + lax.broadcasted_iota(jnp.int32, s.shape, 2)
        s = jnp.where(kv_pos < seq_len, s, -1e30)

    m_prev = m_s[...]
    m_new = jnp.maximum(m_prev, s.max(axis=-1, keepdims=True))
    alpha = jnp.exp(m_prev - m_new)
    p = jnp.exp(s - m_new)
    l_s[...] = alpha * l_s[...] + p.sum(axis=-1, keepdims=True)
    acc_s[...] = alpha * acc_s[...] + jnp.einsum(
        'hqk,hkd->hqd', p.astype(compute_dtype), v,
        preferred_element_type=jnp.float32)
    m_s[...] = m_new

    @pl.when(ki == pl.num_programs(2) - 1)
    def _finalize():
        inv_l = pl.reciprocal(l_s[...], approx=True)              # EUP, ~free
        out = acc_s[...] * inv_l                                  # (h, bq, dh)
        _finalize_output(out, w_out_ref, b_out_ref, o_ref,
                         heads=heads, project_out=project_out,
                         compute_dtype=compute_dtype)


# ---------------------------------------------------------------------------
# Wrapper
# ---------------------------------------------------------------------------
def self_attention(x, w_qkv, w_out=None, b_out=None, *, heads,
                   block_q=128, block_kv=128, use_bf16=False):
    """SelfAttention forward.

    x:      (B, N, D) activations.
    w_qkv:  (D, 3*inner) to_qkv weight stored (in, out)  [= torch weight.T].
    w_out:  (inner, D)  to_out weight stored (in, out)   [= torch weight.T];
            required iff project_out (i.e. unless heads == 1).
    b_out:  (D,) to_out bias (torch nn.Linear default); zeros if None.
    use_bf16: bf16 MXU operands with f32 accumulation (recommended v6e/v7x).
    """
    B, N, D = x.shape
    dim_head = D // heads
    inner = dim_head * heads
    project_out = not (heads == 1 and dim_head == D)
    scale = float(dim_head) ** -0.5
    compute_dtype = jnp.bfloat16 if use_bf16 else jnp.float32

    if project_out and w_out is None:
        raise ValueError("w_out is required when project_out is True")
    assert w_qkv.shape == (D, 3 * inner)

    # ---- tiling / padding (8/128-aligned tiles, lane-dense feature dims) ----
    n8 = _round_up(N, 8)
    bq = min(block_q, n8)
    bkv = min(block_kv, n8)
    n_pad = _round_up(n8, math.lcm(bq, bkv))
    d_pad = _round_up(D, 128)
    needs_mask = n_pad != N
    # NOTE: dim_head itself is left unpadded (it equals the full lane extent of
    # the q/k/v arrays, which satisfies the BlockSpec rule).

    x_p = x
    if n_pad != N or d_pad != D:
        x_p = jnp.pad(x, ((0, 0), (0, n_pad - N), (0, d_pad - D)))
    w_qkv_p = w_qkv if d_pad == D else jnp.pad(w_qkv, ((0, d_pad - D), (0, 0)))

    # ---- kernel 1: QKV projection (+ head split, scale folded into q) ----
    qkv_struct = jax.ShapeDtypeStruct((B, heads, n_pad, dim_head), compute_dtype)
    proj_kernel = functools.partial(
        _qkv_proj_kernel, heads=heads, dim_head=dim_head, scale=scale,
        compute_dtype=compute_dtype)
    q, k, v = pl.pallas_call(
        proj_kernel,
        out_shape=(qkv_struct, qkv_struct, qkv_struct),
        grid_spec=pltpu.PrefetchScalarGridSpec(
            num_scalar_prefetch=0,
            grid=(B, n_pad // bq),
            in_specs=[
                pl.BlockSpec((1, bq, d_pad), lambda b, i: (b, i, 0)),
                pl.BlockSpec((d_pad, 3 * inner), lambda b, i: (0, 0)),
            ],
            out_specs=[
                pl.BlockSpec((1, heads, bq, dim_head), lambda b, i: (b, 0, i, 0)),
                pl.BlockSpec((1, heads, bq, dim_head), lambda b, i: (b, 0, i, 0)),
                pl.BlockSpec((1, heads, bq, dim_head), lambda b, i: (b, 0, i, 0)),
            ],
        ),
        compiler_params=pltpu.CompilerParams(
            dimension_semantics=("parallel", "parallel"),
            vmem_limit_bytes=_VMEM_LIMIT_BYTES),
    )(x_p, w_qkv_p)

    # ---- kernel 2: attention + fused output projection/bias ----
    d_out = d_pad if project_out else inner
    single_pass = (n_pad // bkv) == 1
    n_q_tiles = n_pad // bq

    inputs = [q, k, v]
    if single_pass:
        in_specs = [
            pl.BlockSpec((1, heads, bq, dim_head), lambda b, qi: (b, 0, qi, 0)),
            pl.BlockSpec((1, heads, n_pad, dim_head), lambda b, qi: (b, 0, 0, 0)),
            pl.BlockSpec((1, heads, n_pad, dim_head), lambda b, qi: (b, 0, 0, 0)),
        ]
    else:
        in_specs = [
            pl.BlockSpec((1, heads, bq, dim_head), lambda b, qi, ki: (b, 0, qi, 0)),
            pl.BlockSpec((1, heads, bkv, dim_head), lambda b, qi, ki: (b, 0, ki, 0)),
            pl.BlockSpec((1, heads, bkv, dim_head), lambda b, qi, ki: (b, 0, ki, 0)),
        ]

    if project_out:
        w_out_p = w_out if d_pad == D else jnp.pad(w_out, ((0, 0), (0, d_pad - D)))
        w_out_r = w_out_p.reshape(heads, dim_head, d_pad)   # rows grouped by head
        bias = b_out if b_out is not None else jnp.zeros((D,), x.dtype)
        bias_p = jnp.pad(bias, (0, d_pad - D)).reshape(1, d_pad).astype(jnp.float32)
        inputs += [w_out_r, bias_p]
        if single_pass:
            in_specs += [
                pl.BlockSpec((heads, dim_head, d_pad), lambda b, qi: (0, 0, 0)),
                pl.BlockSpec((1, d_pad), lambda b, qi: (0, 0)),
            ]
        else:
            in_specs += [
                pl.BlockSpec((heads, dim_head, d_pad), lambda b, qi, ki: (0, 0, 0)),
                pl.BlockSpec((1, d_pad), lambda b, qi, ki: (0, 0)),
            ]

    if single_pass:
        attn_kernel = functools.partial(
            _attn_single_kernel, heads=heads, seq_len=N, needs_mask=needs_mask,
            project_out=project_out, compute_dtype=compute_dtype)
        grid = (B, n_q_tiles)
        out_spec = pl.BlockSpec((1, bq, d_out), lambda b, qi: (b, qi, 0))
        scratch_shapes = []
        dim_sem = ("parallel", "parallel")
    else:
        attn_kernel = functools.partial(
            _flash_attn_kernel, heads=heads, seq_len=N, block_kv=bkv,
            needs_mask=needs_mask, project_out=project_out,
            compute_dtype=compute_dtype)
        grid = (B, n_q_tiles, n_pad // bkv)
        out_spec = pl.BlockSpec((1, bq, d_out), lambda b, qi, ki: (b, qi, 0))
        scratch_shapes = [
            pltpu.VMEM((heads, bq, 1), jnp.float32),          # running max
            pltpu.VMEM((heads, bq, 1), jnp.float32),          # running sum
            pltpu.VMEM((heads, bq, dim_head), jnp.float32),   # output acc
        ]
        dim_sem = ("parallel", "parallel", "arbitrary")

    out = pl.pallas_call(
        attn_kernel,
        out_shape=jax.ShapeDtypeStruct((B, n_pad, d_out), x.dtype),
        grid_spec=pltpu.PrefetchScalarGridSpec(
            num_scalar_prefetch=0,
            grid=grid,
            in_specs=in_specs,
            out_specs=out_spec,
            scratch_shapes=scratch_shapes,
        ),
        compiler_params=pltpu.CompilerParams(
            dimension_semantics=dim_sem,
            vmem_limit_bytes=_VMEM_LIMIT_BYTES),
    )(*inputs)

    return out[:, :N, :D]


# ---------------------------------------------------------------------------
# Pure-JAX reference (HIGHEST matmul precision to serve as ground truth)
# ---------------------------------------------------------------------------
def _reference(x, w_qkv, w_out=None, b_out=None, *, heads):
    B, N, D = x.shape
    dim_head = D // heads
    inner = dim_head * heads
    project_out = not (heads == 1 and dim_head == D)
    scale = float(dim_head) ** -0.5
    hp = lax.Precision.HIGHEST

    qkv = jnp.dot(x, w_qkv, precision=hp)
    q, k, v = jnp.split(qkv, 3, axis=-1)

    def to_heads(t):  # 'b n (h d) -> b h n d'
        return t.reshape(B, N, heads, dim_head).transpose(0, 2, 1, 3)

    q, k, v = map(to_heads, (q, k, v))
    dots = jnp.einsum("bhnd,bhmd->bhnm", q, k, precision=hp) * scale
    attn = jax.nn.softmax(dots, axis=-1)
    out = jnp.einsum("bhnm,bhmd->bhnd", attn, v, precision=hp)
    out = out.transpose(0, 2, 1, 3).reshape(B, N, inner)    # 'b h n d -> b n (h d)'
    if project_out:
        out = jnp.dot(out, w_out, precision=hp)
        if b_out is not None:
            out = out + b_out
    return out


if __name__ == "__main__":
    # Tolerances cover MXU default-precision differences vs the HIGHEST-precision
    # XLA reference plus the approximate-reciprocal epilogue.
    def check(name, got, want, atol, rtol):
        assert got.shape == want.shape, (name, got.shape, want.shape)
        err = float(jnp.max(jnp.abs(got - want)))
        assert jnp.allclose(got, want, atol=atol, rtol=rtol), \
            f"{name}: max abs err {err}"

    key = jax.random.PRNGKey(0)

    # Case 1: batch=2, seq=8, dim=32, heads=2 (project_out=True, with bias).
    # Exercises the single-pass attention path.
    B, N, D, H = 2, 8, 32, 2
    k1, k2, k3, k4, key = jax.random.split(key, 5)
    x = jax.random.normal(k1, (B, N, D), jnp.float32)
    w_qkv = jax.random.normal(k2, (D, 3 * D), jnp.float32) * 0.05
    w_out = jax.random.normal(k3, (D, D), jnp.float32) * 0.05
    b_out = jax.random.normal(k4, (D,), jnp.float32) * 0.1

    y = jax.block_until_ready(self_attention(x, w_qkv, w_out, b_out, heads=H))
    y_ref = _reference(x, w_qkv, w_out, b_out, heads=H)
    check("heads=2 f32", y, y_ref, 1e-2, 1e-2)

    # bf16 MXU-operand path (recommended on v6e/v7x), looser tolerance.
    yb = jax.block_until_ready(
        self_attention(x, w_qkv, w_out, b_out, heads=H, use_bf16=True))
    check("heads=2 bf16", yb, y_ref, 5e-2, 5e-2)

    # Case 2: heads=1 -> to_out is Identity; w_out / bias are never passed or DMA'd.
    y1 = jax.block_until_ready(self_attention(x, w_qkv, heads=1))
    y1_ref = _reference(x, w_qkv, heads=1)
    check("heads=1 identity", y1, y1_ref, 1e-2, 1e-2)

    # Case 3: exercises the flash (multi-KV-tile) path with sequence padding +
    # masked KV tiles (N=200 -> 256 with 128-row tiles) and feature padding
    # (D=64 -> 128).
    B2, N2, D2, H2 = 1, 200, 64, 4
    k1, k2, k3, k4, key = jax.random.split(key, 5)
    x2 = jax.random.normal(k1, (B2, N2, D2), jnp.float32)
    w_qkv2 = jax.random.normal(k2, (D2, 3 * D2), jnp.float32) * 0.05
    w_out2 = jax.random.normal(k3, (D2, D2), jnp.float32) * 0.05
    b_out2 = jax.random.normal(k4, (D2,), jnp.float32) * 0.1
    y2 = jax.block_until_ready(
        self_attention(x2, w_qkv2, w_out2, b_out2, heads=H2))
    y2_ref = _reference(x2, w_qkv2, w_out2, b_out2, heads=H2)
    check("padded/tiled f32", y2, y2_ref, 1e-2, 1e-2)

    print("KERNEL_OK")
</pallas_src>

<mosaic_0001>
module attributes {stable_mosaic.version = 11 : i64} {
  func.func @_qkv_proj_kernel(%arg0: i32, %arg1: i32, %arg2: memref<1x8x128xf32, #tpu.memory_space<vmem>>, %arg3: memref<128x96xf32, #tpu.memory_space<vmem>>, %arg4: memref<1x2x8x16xf32, #tpu.memory_space<vmem>>, %arg5: memref<1x2x8x16xf32, #tpu.memory_space<vmem>>, %arg6: memref<1x2x8x16xf32, #tpu.memory_space<vmem>>) attributes {dimension_semantics = [#tpu.dimension_semantics<parallel>, #tpu.dimension_semantics<parallel>], iteration_bounds = array<i64: 2, 1>, scalar_prefetch = 0 : i64, scratch_operands = 0 : i64, tpu.core_type = #tpu.core_type<tc>, window_params = [{transform_indices = @transform_0, window_bounds = array<i64: 1, 8, 128>}, {pipeline_mode = #tpu.pipeline_mode<synchronous>, transform_indices = @transform_1, window_bounds = array<i64: 128, 96>}, {transform_indices = @transform_2, window_bounds = array<i64: 1, 2, 8, 16>}, {transform_indices = @transform_3, window_bounds = array<i64: 1, 2, 8, 16>}, {transform_indices = @transform_4, window_bounds = array<i64: 1, 2, 8, 16>}]} {
    %c0 = arith.constant 0 : index
    %c0_0 = arith.constant 0 : index
    %c0_1 = arith.constant 0 : index
    %0 = vector.load %arg2[%c0, %c0_0, %c0_1] : memref<1x8x128xf32, #tpu.memory_space<vmem>>, vector<1x8x128xf32>
    %1 = vector.shape_cast %0 : vector<1x8x128xf32> to vector<8x128xf32>
    %c0_2 = arith.constant 0 : index
    %c0_3 = arith.constant 0 : index
    %2 = vector.load %arg3[%c0_2, %c0_3] : memref<128x96xf32, #tpu.memory_space<vmem>>, vector<128x96xf32>
    %cst = arith.constant dense<0.000000e+00> : vector<8x96xf32>
    %3 = tpu.matmul %1, %2, %cst {dimension_numbers = #tpu.dot_dimension_numbers<[1], [0], [0], [1], [0, 0, 1, 1], [], []>} : vector<8x128xf32>, vector<128x96xf32>, vector<8x96xf32> -> vector<8x96xf32>
    %4 = vector.extract_strided_slice %3 {offsets = [0, 0], sizes = [8, 16], strides = [1, 1]} : vector<8x96xf32> to vector<8x16xf32>
    %cst_4 = arith.constant 2.500000e-01 : f32
    %5 = vector.broadcast %cst_4 : f32 to vector<8x16xf32>
    %6 = arith.mulf %4, %5 : vector<8x16xf32>
    %c0_5 = arith.constant 0 : index
    %c0_6 = arith.constant 0 : index
    %c0_7 = arith.constant 0 : index
    %c0_8 = arith.constant 0 : index
    %7 = vector.load %arg4[%c0_5, %c0_6, %c0_7, %c0_8] : memref<1x2x8x16xf32, #tpu.memory_space<vmem>>, vector<1x1x8x16xf32>
    %8 = vector.shape_cast %7 : vector<1x1x8x16xf32> to vector<8x16xf32>
    %9 = vector.shape_cast %6 : vector<8x16xf32> to vector<1x1x8x16xf32>
    tpu.vector_store %arg4[%c0_5, %c0_6, %c0_7, %c0_8], %9 {strides = array<i32>} : memref<1x2x8x16xf32, #tpu.memory_space<vmem>>, vector<1x1x8x16xf32>,
    %10 = vector.extract_strided_slice %3 {offsets = [0, 32], sizes = [8, 16], strides = [1, 1]} : vector<8x96xf32> to vector<8x16xf32>
    %c0_9 = arith.constant 0 : index
    %c0_10 = arith.constant 0 : index
    %c0_11 = arith.constant 0 : index
    %c0_12 = arith.constant 0 : index
    %11 = vector.load %arg5[%c0_9, %c0_10, %c0_11, %c0_12] : memref<1x2x8x16xf32, #tpu.memory_space<vmem>>, vector<1x1x8x16xf32>
    %12 = vector.shape_cast %11 : vector<1x1x8x16xf32> to vector<8x16xf32>
    %13 = vector.shape_cast %10 : vector<8x16xf32> to vector<1x1x8x16xf32>
    tpu.vector_store %arg5[%c0_9, %c0_10, %c0_11, %c0_12], %13 {strides = array<i32>} : memref<1x2x8x16xf32, #tpu.memory_space<vmem>>, vector<1x1x8x16xf32>,
    %14 = vector.extract_strided_slice %3 {offsets = [0, 64], sizes = [8, 16], strides = [1, 1]} : vector<8x96xf32> to vector<8x16xf32>
    %c0_13 = arith.constant 0 : index
    %c0_14 = arith.constant 0 : index
    %c0_15 = arith.constant 0 : index
    %c0_16 = arith.constant 0 : index
    %15 = vector.load %arg6[%c0_13, %c0_14, %c0_15, %c0_16] : memref<1x2x8x16xf32, #tpu.memory_space<vmem>>, vector<1x1x8x16xf32>
    %16 = vector.shape_cast %15 : vector<1x1x8x16xf32> to vector<8x16xf32>
    %17 = vector.shape_cast %14 : vector<8x16xf32> to vector<1x1x8x16xf32>
    tpu.vector_store %arg6[%c0_13, %c0_14, %c0_15, %c0_16], %17 {strides = array<i32>} : memref<1x2x8x16xf32, #tpu.memory_space<vmem>>, vector<1x1x8x16xf32>,
    %18 = vector.extract_strided_slice %3 {offsets = [0, 16], sizes = [8, 16], strides = [1, 1]} : vector<8x96xf32> to vector<8x16xf32>
    %cst_17 = arith.constant 2.500000e-01 : f32
    %19 = vector.broadcast %cst_17 : f32 to vector<8x16xf32>
    %20 = arith.mulf %18, %19 : vector<8x16xf32>
    %c0_18 = arith.constant 0 : index
    %c1 = arith.constant 1 : index
    %c0_19 = arith.constant 0 : index
    %c0_20 = arith.constant 0 : index
    %21 = vector.load %arg4[%c0_18, %c1, %c0_19, %c0_20] : memref<1x2x8x16xf32, #tpu.memory_space<vmem>>, vector<1x1x8x16xf32>
    %22 = vector.shape_cast %21 : vector<1x1x8x16xf32> to vector<8x16xf32>
    %23 = vector.shape_cast %20 : vector<8x16xf32> to vector<1x1x8x16xf32>
    tpu.vector_store %arg4[%c0_18, %c1, %c0_19, %c0_20], %23 {strides = array<i32>} : memref<1x2x8x16xf32, #tpu.memory_space<vmem>>, vector<1x1x8x16xf32>,
    %24 = vector.extract_strided_slice %3 {offsets = [0, 48], sizes = [8, 16], strides = [1, 1]} : vector<8x96xf32> to vector<8x16xf32>
    %c0_21 = arith.constant 0 : index
    %c1_22 = arith.constant 1 : index
    %c0_23 = arith.constant 0 : index
    %c0_24 = arith.constant 0 : index
    %25 = vector.load %arg5[%c0_21, %c1_22, %c0_23, %c0_24] : memref<1x2x8x16xf32, #tpu.memory_space<vmem>>, vector<1x1x8x16xf32>
    %26 = vector.shape_cast %25 : vector<1x1x8x16xf32> to vector<8x16xf32>
    %27 = vector.shape_cast %24 : vector<8x16xf32> to vector<1x1x8x16xf32>
    tpu.vector_store %arg5[%c0_21, %c1_22, %c0_23, %c0_24], %27 {strides = array<i32>} : memref<1x2x8x16xf32, #tpu.memory_space<vmem>>, vector<1x1x8x16xf32>,
    %28 = vector.extract_strided_slice %3 {offsets = [0, 80], sizes = [8, 16], strides = [1, 1]} : vector<8x96xf32> to vector<8x16xf32>
    %c0_25 = arith.constant 0 : index
    %c1_26 = arith.constant 1 : index
    %c0_27 = arith.constant 0 : index
    %c0_28 = arith.constant 0 : index
    %29 = vector.load %arg6[%c0_25, %c1_26, %c0_27, %c0_28] : memref<1x2x8x16xf32, #tpu.memory_space<vmem>>, vector<1x1x8x16xf32>
    %30 = vector.shape_cast %29 : vector<1x1x8x16xf32> to vector<8x16xf32>
    %31 = vector.shape_cast %28 : vector<8x16xf32> to vector<1x1x8x16xf32>
    tpu.vector_store %arg6[%c0_25, %c1_26, %c0_27, %c0_28], %31 {strides = array<i32>} : memref<1x2x8x16xf32, #tpu.memory_space<vmem>>, vector<1x1x8x16xf32>,
    return
  }
  func.func @transform_0(%arg0: i32, %arg1: i32) -> (i32, i32, i32) {
    %c0_i32 = arith.constant 0 : i32
    %c0_i32_0 = arith.constant 0 : i32
    return %arg0, %arg1, %c0_i32 : i32, i32, i32
  }
  func.func @transform_1(%arg0: i32, %arg1: i32) -> (i32, i32) {
    %c0_i32 = arith.constant 0 : i32
    %c0_i32_0 = arith.constant 0 : i32
    %c0_i32_1 = arith.constant 0 : i32
    return %c0_i32, %c0_i32_0 : i32, i32
  }
  func.func @transform_2(%arg0: i32, %arg1: i32) -> (i32, i32, i32, i32) {
    %c0_i32 = arith.constant 0 : i32
    %c0_i32_0 = arith.constant 0 : i32
    %c0_i32_1 = arith.constant 0 : i32
    return %arg0, %c0_i32, %arg1, %c0_i32_0 : i32, i32, i32, i32
  }
  func.func @transform_3(%arg0: i32, %arg1: i32) -> (i32, i32, i32, i32) {
    %c0_i32 = arith.constant 0 : i32
    %c0_i32_0 = arith.constant 0 : i32
    %c0_i32_1 = arith.constant 0 : i32
    return %arg0, %c0_i32, %arg1, %c0_i32_0 : i32, i32, i32, i32
  }
  func.func @transform_4(%arg0: i32, %arg1: i32) -> (i32, i32, i32, i32) {
    %c0_i32 = arith.constant 0 : i32
    %c0_i32_0 = arith.constant 0 : i32
    %c0_i32_1 = arith.constant 0 : i32
    return %arg0, %c0_i32, %arg1, %c0_i32_0 : i32, i32, i32, i32
  }
}

</mosaic_0001>

<llo_original>
// kernel: tpu_custom_call.1
$region0: #{tpu_custom_call.1}
  #allocation0 [shape = 'u32[]', space=smem, size = 0x4, offset = 0x4, fixed_abs, tag = 'smem constant byte address 0x4 - core index']
  #allocation1 [shape = 'u32[144,128]{1,0:T(1,128)}', space=vmem, size = 0x12000, scoped, tag = 'internal scratch']
  %s0 = inlined_call_operand.vmem [shape: f32[2,8,128], index: 0, kind: input, shape index: {}]
  %s1 = inlined_call_operand.vmem [shape: f32[128,96], index: 1, kind: input, shape index: {}]
  %s2 = inlined_call_operand.hbm [shape: f32[2,2,8,16], index: 2, kind: output, shape index: {0}]
  %s3 = inlined_call_operand.hbm [shape: f32[2,2,8,16], index: 3, kind: output, shape index: {1}]
  %s4 = inlined_call_operand.hbm [shape: f32[2,2,8,16], index: 4, kind: output, shape index: {2}]
  %5 = xla_tuple %s2, %s3, %s4
  %s6 = sld [smem:[#allocation0]]
  $region57: #{tpu_custom_call.1} parent=0
    _
  %s8 = ssub.s32 1, %s6
  %s9 = scalar_select 0, %s8, %s6
  $region1: #{tpu_custom_call.1} parent=0
    #allocation2 [shape = 'u8[16384]{0}', space=vmem, size = 0x4000, scoped, tag = 'output window, operand 0']
    #allocation3 [shape = 's32[2]{0}', space=sflag, size = 0x8, scoped, tag = 'scoped memory for tpu_custom_call.1']
    #allocation4 [shape = 'u8[16384]{0}', space=vmem, size = 0x4000, scoped, tag = 'output window, operand 1']
    #allocation5 [shape = 's32[2]{0}', space=sflag, size = 0x8, scoped, tag = 'scoped memory for tpu_custom_call.1']
    #allocation6 [shape = 'u8[16384]{0}', space=vmem, size = 0x4000, scoped, tag = 'output window, operand 2']
    %10 = vsyncpa [#allocation3], 0
    %s11 = scalar_lea.sflag [#allocation3], 1
    %12 = vsyncpa %s11, 0
    %13 = vsyncpa [#allocation5], 0
    %s14 = scalar_lea.sflag [#allocation5], 1
    %15 = vsyncpa %s14, 0
    loop: start=0, step=1, limit=4
    $region2: #{tpu_custom_call.1} parent=1 // loop_pre_header
      _
    $region3: #{tpu_custom_call.1} parent=1 // loop_header
      %s17 = sphi 0, %s21
      %p18 = scmp.ge.s32.totalorder %s17, 4
      %s24 = sphi 0, %s36
      %s25 = sphi 0, %s32
      %s26 = sphi 0, %s24
      %s27 = sphi 0, %s25
      %s28 = sphi 0, %s26
      %s29 = sphi 0, %s27
      %s41 = sphi 0, %s43
      %s44 = sphi 0, %s41
      %s45 = sphi 0, %s44
      %s61 = sphi 0, %s45
      %s65 = sphi 0, %s65
      %s67 = sphi 0, %s65
      %s68 = sphi 0, %s67
      %s82 = sphi 0, %s68
      %s90 = sphi 0, %s92
      %s93 = sphi 0, %s90
      %s94 = sphi 0, %s93
      %s110 = sphi 0, %s94
      %s118 = sphi 0, %s120
      %s121 = sphi 0, %s118
      %s122 = sphi 0, %s121
      %s138 = sphi 0, %s122
      %s146 = sphi 0, %s148
      %s149 = sphi 0, %s146
      %s150 = sphi 0, %s149
      %s166 = sphi 0, %s150
    $region4: #{tpu_custom_call.1} parent=1 // loop_header_branch
      %20 = sbr.rel (%p18) target = $region8
    $region5: #{tpu_custom_call.1} parent=1 // loop_body
      %s22 = ssub.s32 %s17, 1
      %s23 = ssub.s32 %s17, 2
      %s30 = sadd.s32 1, %s25
      %p31 = scmp.ge.s32.totalorder %s30, 1
      %s32 = scalar_select %p31, 0, %s30
      %s33 = sadd.s32 1, %s24
      %s34 = scalar_select %p31, %s33, %s24
      %p35 = scmp.ge.s32.totalorder %s34, 2
      %s36 = scalar_select %p35, 0, %s34
      %s37 = ssub.s32 %s24, %s36
      %s38 = ssub.s32 %s25, %s32
      %s39 = sor.u32 %s37, %s38
      %p40 = scmp.eq.s32.totalorder %s39, 0
      %s42 = sadd.s32 %s41, 1
      %s43 = scalar_select %p40, %s41, %s42
      %p46 = pneg %p40
      %p47 = scmp.eq.s32.totalorder %s17, 1
      %p48 = por %p46, %p47
      %p49 = scmp.ne.s32.totalorder %s41, %s44
      %p50 = scmp.eq.s32.totalorder %s17, 0
      %p51 = por %p49, %p50
      %p52 = scmp.ne.s32.totalorder %s41, %s44
      %p53 = scmp.eq.s32.totalorder %s22, 1
      %p54 = por %p52, %p53
      %p55 = scmp.ne.s32.totalorder %s44, %s45
      %p56 = scmp.eq.s32.totalorder %s22, 0
      %p57 = por %p55, %p56
      %p58 = scmp.ne.s32.totalorder %s44, %s45
      %p59 = scmp.eq.s32.totalorder %s23, 1
      %p60 = por %p58, %p59
      %p62 = scmp.ne.s32.totalorder %s45, %s61
      %p63 = scmp.eq.s32.totalorder %s23, 0
      %p64 = por %p62, %p63
      %s66 = sadd.s32 %s65, 1
      %p69 = scmp.eq.s32.totalorder %s17, 1
      %p70 = scmp.ne.s32.totalorder %s65, %s67
      %p71 = scmp.eq.s32.totalorder %s17, 0
      %p72 = por %p70, %p71
      %p73 = scmp.ne.s32.totalorder %s65, %s67
      %p74 = scmp.eq.s32.totalorder %s22, 1
      %p75 = por %p73, %p74
      %p76 = scmp.ne.s32.totalorder %s67, %s68
      %p77 = scmp.eq.s32.totalorder %s22, 0
      %p78 = por %p76, %p77
      %p79 = scmp.ne.s32.totalorder %s67, %s68
      %p80 = scmp.eq.s32.totalorder %s23, 1
      %p81 = por %p79, %p80
      %p83 = scmp.ne.s32.totalorder %s68, %s82
      %p84 = scmp.eq.s32.totalorder %s23, 0
      %p85 = por %p83, %p84
      %s86 = ssub.s32 %s24, %s36
      %s87 = ssub.s32 %s25, %s32
      %s88 = sor.u32 %s86, %s87
      %p89 = scmp.eq.s32.totalorder %s88, 0
      %s91 = sadd.s32 %s90, 1
      %s92 = scalar_select %p89, %s90, %s91
      %p95 = pneg %p89
      %p96 = scmp.eq.s32.totalorder %s17, 1
      %p97 = por %p95, %p96
      %p98 = scmp.ne.s32.totalorder %s90, %s93
      %p99 = scmp.eq.s32.totalorder %s17, 0
      %p100 = por %p98, %p99
      %p101 = scmp.ne.s32.totalorder %s90, %s93
      %p102 = scmp.eq.s32.totalorder %s22, 1
      %p103 = por %p101, %p102
      %p104 = scmp.ne.s32.totalorder %s93, %s94
      %p105 = scmp.eq.s32.totalorder %s22, 0
      %p106 = por %p104, %p105
      %p107 = scmp.ne.s32.totalorder %s93, %s94
      %p108 = scmp.eq.s32.totalorder %s23, 1
      %p109 = por %p107, %p108
      %p111 = scmp.ne.s32.totalorder %s94, %s110
      %p112 = scmp.eq.s32.totalorder %s23, 0
      %p113 = por %p111, %p112
      %s114 = ssub.s32 %s24, %s36
      %s115 = ssub.s32 %s25, %s32
      %s116 = sor.u32 %s114, %s115
      %p117 = scmp.eq.s32.totalorder %s116, 0
      %s119 = sadd.s32 %s118, 1
      %s120 = scalar_select %p117, %s118, %s119
      %p123 = pneg %p117
      %p124 = scmp.eq.s32.totalorder %s17, 1
      %p125 = por %p123, %p124
      %p126 = scmp.ne.s32.totalorder %s118, %s121
      %p127 = scmp.eq.s32.totalorder %s17, 0
      %p128 = por %p126, %p127
      %p129 = scmp.ne.s32.totalorder %s118, %s121
      %p130 = scmp.eq.s32.totalorder %s22, 1
      %p131 = por %p129, %p130
      %p132 = scmp.ne.s32.totalorder %s121, %s122
      %p133 = scmp.eq.s32.totalorder %s22, 0
      %p134 = por %p132, %p133
      %p135 = scmp.ne.s32.totalorder %s121, %s122
      %p136 = scmp.eq.s32.totalorder %s23, 1
      %p137 = por %p135, %p136
      %p139 = scmp.ne.s32.totalorder %s122, %s138
      %p140 = scmp.eq.s32.totalorder %s23, 0
      %p141 = por %p139, %p140
      %s142 = ssub.s32 %s24, %s36
      %s143 = ssub.s32 %s25, %s32
      %s144 = sor.u32 %s142, %s143
      %p145 = scmp.eq.s32.totalorder %s144, 0
      %s147 = sadd.s32 %s146, 1
      %s148 = scalar_select %p145, %s146, %s147
      %p151 = pneg %p145
      %p152 = scmp.eq.s32.totalorder %s17, 1
      %p153 = por %p151, %p152
      %p154 = scmp.ne.s32.totalorder %s146, %s149
      %p155 = scmp.eq.s32.totalorder %s17, 0
      %p156 = por %p154, %p155
      %p157 = scmp.ne.s32.totalorder %s146, %s149
      %p158 = scmp.eq.s32.totalorder %s22, 1
      %p159 = por %p157, %p158
      %p160 = scmp.ne.s32.totalorder %s149, %s150
      %p161 = scmp.eq.s32.totalorder %s22, 0
      %p162 = por %p160, %p161
      %p163 = scmp.ne.s32.totalorder %s149, %s150
      %p164 = scmp.eq.s32.totalorder %s23, 1
      %p165 = por %p163, %p164
      %p167 = scmp.ne.s32.totalorder %s150, %s166
      %p168 = scmp.eq.s32.totalorder %s23, 0
      %p169 = por %p167, %p168
      %p170 = scmp.le.s32.totalorder 1, %s17
      %p171 = scmp.lt.s32.totalorder %s17, 3
      %p172 = pnand %p170, %p171
      %p173 = pneg %p172
      // Predicated region
      $region9: #{tpu_custom_call.1} parent=5 // pred_check
        _
      $region10: #{tpu_custom_call.1} parent=5 // pred_check_branch
        %175 = sbr.rel (%p172) target = $region12
      $region11: #{tpu_custom_call.1} parent=5 // pred_region
        %s176 = ssub.s32 %s17, 1
        // Predicated region
        $region13: #{tpu_custom_call.1} parent=11 // pred_check
          %p177 = pneg %p78
        $region14: #{tpu_custom_call.1} parent=11 // pred_check_branch
          %179 = sbr.rel (%p177) target = $region16
        $region15: #{tpu_custom_call.1} parent=11 // pred_region
          _
        $region16: #{tpu_custom_call.1} parent=11 // pred_fallthru
          _
      $region12: #{tpu_custom_call.1} parent=5 // pred_fallthru
        _
      %p180 = scmp.lt.s32.totalorder %s17, 2
      // Predicated region
      $region17: #{tpu_custom_call.1} parent=5 // pred_check
        %p181 = pneg %p180
      $region18: #{tpu_custom_call.1} parent=5 // pred_check_branch
        %183 = sbr.rel (%p181) target = $region20
      $region19: #{tpu_custom_call.1} parent=5 // pred_region
        // Predicated region
        $region21: #{tpu_custom_call.1} parent=19 // pred_check
          %p184 = pneg %p51
        $region22: #{tpu_custom_call.1} parent=19 // pred_check_branch
          %186 = sbr.rel (%p184) target = $region24
        $region23: #{tpu_custom_call.1} parent=19 // pred_region
          %p187 = scmp.lt.s32.totalorder %s24, 1
          %s188 = scalar_select %p187, %s24, 1
          %p189 = scmp.lt.s32.totalorder %s25, 0
          %s190 = scalar_select %p189, %s25, 0
          %s191 = sadd.s32 %s190, %s188
          %s192 = smul.addr %s191, 8
          %s193 = scalar_lea.vmem %s0, %s192
        $region24: #{tpu_custom_call.1} parent=19 // pred_fallthru
          _
      $region20: #{tpu_custom_call.1} parent=5 // pred_fallthru
        _
      %p194 = scmp.le.s32.totalorder 1, %s17
      %p195 = scmp.lt.s32.totalorder %s17, 3
      %p196 = pnand %p194, %p195
      %p197 = pneg %p196
      // Predicated region
      $region25: #{tpu_custom_call.1} parent=5 // pred_check
        _
      $region26: #{tpu_custom_call.1} parent=5 // pred_check_branch
        %199 = sbr.rel (%p196) target = $region28
      $region27: #{tpu_custom_call.1} parent=5 // pred_region
        %s200 = ssub.s32 %s17, 1
        %p201 = scmp.lt.s32.totalorder %s26, 1
        %s202 = scalar_select %p201, %s26, 1
        %p203 = scmp.lt.s32.totalorder %s27, 0
        %s204 = scalar_select %p203, %s27, 0
        %s205 = sadd.s32 %s204, %s202
        %s206 = smul.addr %s205, 8
        %s207 = scalar_lea.vmem %s0, %s206
        %p208 = pneg %p57
        %p209 = pneg %p54
        %p210 = pneg %p78
        %p211 = pneg %p75
        %p212 = pneg %p106
        %p213 = pneg %p103
        %s214 = sand.u32 %s93, 1
        %s215 = scalar_lea.sflag [#allocation3], %s214
        %s216 = sand.u32 %s93, 1
        %s217 = smul.addr %s216, 16
        %s218 = scalar_lea.vmem [#allocation2], %s217
        %p219 = pneg %p134
        %p220 = pneg %p131
        %s221 = sand.u32 %s22, 1
        %s222 = scalar_lea.sflag [#allocation5], %s221
        %s223 = sand.u32 %s121, 1
        %s224 = smul.addr %s223, 16
        %s225 = scalar_lea.vmem [#allocation4], %s224
        %p226 = pneg %p162
        %p227 = pneg %p159
        %s228 = sand.u32 %s22, 1
        %s229 = scalar_lea.sflag [#allocation5], %s228
        %s230 = sand.u32 %s149, 1
        %s231 = smul.addr %s230, 16
        %s232 = scalar_lea.vmem [#allocation6], %s231
        %p233 = scmp.lt.s32.totalorder %s26, 1
        %s234 = scalar_select %p233, %s26, 1
        %p235 = scmp.lt.s32.totalorder %s27, 0
        %s236 = scalar_select %p235, %s27, 0
        %s237 = sadd.s32 %s236, %s234
        %s238 = smul.addr %s237, 8
        %s239 = scalar_lea.vmem %s0, %s238
        %v240 = vld [vmem:[%s239] sm:$0xff]
        %v241 = vld [vmem:[%s1] sm:$0xff]
        %v242 = vld [vmem:[%s1 + $0x8] sm:$0xff]
        %v243 = vld [vmem:[%s1 + $0x10] sm:$0xff]
        %v244 = vld [vmem:[%s1 + $0x18] sm:$0xff]
        %v245 = vld [vmem:[%s1 + $0x20] sm:$0xff]
        %v246 = vld [vmem:[%s1 + $0x28] sm:$0xff]
        %v247 = vld [vmem:[%s1 + $0x30] sm:$0xff]
        %v248 = vld [vmem:[%s1 + $0x38] sm:$0xff]
        %v249 = vld [vmem:[%s1 + $0x40] sm:$0xff]
        %v250 = vld [vmem:[%s1 + $0x48] sm:$0xff]
        %v251 = vld [vmem:[%s1 + $0x50] sm:$0xff]
        %v252 = vld [vmem:[%s1 + $0x58] sm:$0xff]
        %v253 = vld [vmem:[%s1 + $0x60] sm:$0xff]
        %v254 = vld [vmem:[%s1 + $0x68] sm:$0xff]
        %v255 = vld [vmem:[%s1 + $0x70] sm:$0xff]
        %v256 = vld [vmem:[%s1 + $0x78] sm:$0xff]
        %257 = vmatprep.subr.mxu0 0.0
        %258 = vmatpush1.msra.mxu0 %v241
        %259 = vmatprep.subr.mxu0 0.0
        %260 = vmatpush1.msra.mxu0 %v242
        %261 = vmatprep.subr.mxu0 0.0
        %262 = vmatpush1.msra.mxu0 %v243
        %263 = vmatprep.subr.mxu0 0.0
        %264 = vmatpush1.msra.mxu0 %v244
        %265 = vmatprep.subr.mxu0 0.0
        %266 = vmatpush1.msra.mxu0 %v245
        %267 = vmatprep.subr.mxu0 0.0
        %268 = vmatpush1.msra.mxu0 %v246
        %269 = vmatprep.subr.mxu0 0.0
        %270 = vmatpush1.msra.mxu0 %v247
        %271 = vmatprep.subr.mxu0 0.0
        %272 = vmatpush1.msra.mxu0 %v248
        %273 = vmatprep.subr.mxu0 0.0
        %274 = vmatpush1.msra.mxu0 %v249
        %275 = vmatprep.subr.mxu0 0.0
        %276 = vmatpush1.msra.mxu0 %v250
        %277 = vmatprep.subr.mxu0 0.0
        %278 = vmatpush1.msra.mxu0 %v251
        %279 = vmatprep.subr.mxu0 0.0
        %280 = vmatpush1.msra.mxu0 %v252
        %281 = vmatprep.subr.mxu0 0.0
        %282 = vmatpush1.msra.mxu0 %v253
        %283 = vmatprep.subr.mxu0 0.0
        %284 = vmatpush1.msra.mxu0 %v254
        %285 = vmatprep.subr.mxu0 0.0
        %286 = vmatpush1.msra.mxu0 %v255
        %287 = vmatprep.subr.mxu0 0.0
        %288 = vmatpush1.msra.mxu0 %v256
        %289 = vmatprep.subr.mxu0 0.0
        %290 = vmatpush1.msra.mxu0 0.0
        %291 = vmatprep.subr.mxu0 0.0
        %292 = vmatpush1.msra.mxu0 0.0
        %293 = vmatprep.subr.mxu0 0.0
        %294 = vmatpush1.msra.mxu0 0.0
        %295 = vmatprep.subr.mxu0 0.0
        %296 = vmatpush1.msra.mxu0 0.0
        %297 = vmatprep.subr.mxu0 0.0
        %298 = vmatpush1.msra.mxu0 0.0
        %299 = vmatprep.subr.mxu0 0.0
        %300 = vmatpush1.msra.mxu0 0.0
        %301 = vmatprep.subr.mxu0 0.0
        %302 = vmatpush1.msra.mxu0 0.0
        %303 = vmatprep.subr.mxu0 0.0
        %304 = vmatpush1.msra.mxu0 0.0
        %305 = vmatprep.subr.mxu0 0.0
        %306 = vmatpush1.msra.mxu0 0.0
        %307 = vmatprep.subr.mxu0 0.0
        %308 = vmatpush1.msra.mxu0 0.0
        %309 = vmatprep.subr.mxu0 0.0
        %310 = vmatpush1.msra.mxu0 0.0
        %311 = vmatprep.subr.mxu0 0.0
        %312 = vmatpush1.msra.mxu0 0.0
        %313 = vmatprep.subr.mxu0 0.0
        %314 = vmatpush1.msra.mxu0 0.0
        %315 = vmatprep.subr.mxu0 0.0
        %316 = vmatpush1.msra.mxu0 0.0
        %317 = vmatprep.subr.mxu0 0.0
        %318 = vmatpush1.msra.mxu0 0.0
        %319 = vmatprep.subr.mxu0 0.0
        %320 = vmatpush1.msra.mxu0 0.0
        %321 = vmatprep.mubr.f32.mxu0 0.0
        %322 = vmatmul.mubr.f32.gmra.mrb[0].mxu0 %v240
        %v323 = vpop.f32.mrb[0].mxu0
        %v324 = vadd.f32 0.0, %v323
        %v325 = vpop.f32.mrb[0].mxu0
        %326 = vdwg.mxu0
        %v327 = vmul.f32 %v324, 0.25
        %vm328 = vcmask 130048
        %329 = vst.msk [vmem:[%s218] sm:$0xff] %vm328, %v327
        %331 = vrot.lane.b32.xlu0 %v324, 96
        %v332 = vpop.permute.xlu0 %331
        %334 = vst.msk [vmem:[%s225] sm:$0xff] %vm328, %v332
        %335 = vrot.lane.b32.xlu0 %v324, 64
        %v336 = vpop.permute.xlu0 %335
        %338 = vst.msk [vmem:[%s232] sm:$0xff] %vm328, %v336
        %340 = vrot.lane.b32.xlu0 %v327, 112
        %v341 = vpop.permute.xlu0 %340
        %s343 = scalar_lea.vmem %s218, 8 [#allocation2]
        %344 = vst.msk [vmem:[%s343] sm:$0xff] %vm328, %v341
        %345 = vrot.lane.b32.xlu0 %v324, 80
        %v346 = vpop.permute.xlu0 %345
        %s348 = scalar_lea.vmem %s225, 8 [#allocation4]
        %349 = vst.msk [vmem:[%s348] sm:$0xff] %vm328, %v346
        %350 = vrot.lane.b32.xlu0 %v324, 48
        %v351 = vpop.permute.xlu0 %350
        %s353 = scalar_lea.vmem %s232, 8 [#allocation6]
        %354 = vst.msk [vmem:[%s353] sm:$0xff] %vm328, %v351
        %s355 = sand.u32 %s93, 1
        %s356 = scalar_lea.sflag [#allocation3], %s355
        %s357 = sand.u32 %s93, 1
        %s358 = smul.addr %s357, 16
        %s359 = scalar_lea.vmem [#allocation2], %s358
        %s360 = sand.u32 %s22, 1
        %s361 = scalar_lea.sflag [#allocation5], %s360
        %s362 = sand.u32 %s121, 1
        %s363 = smul.addr %s362, 16
        %s364 = scalar_lea.vmem [#allocation4], %s363
        %s365 = sand.u32 %s22, 1
        %s366 = scalar_lea.sflag [#allocation5], %s365
        %s367 = sand.u32 %s149, 1
        %s368 = smul.addr %s367, 16
        %s369 = scalar_lea.vmem [#allocation6], %s368
        // Predicated region
        $region29: #{tpu_custom_call.1} parent=27 // pred_check
          %p370 = pneg %p103
        $region30: #{tpu_custom_call.1} parent=27 // pred_check_branch
          %372 = sbr.rel (%p370) target = $region32
        $region31: #{tpu_custom_call.1} parent=27 // pred_region
          %s374 = ssub.s32 256, 256
          %375 = vsyncadd %s356, %s374
          %s376 = smul.addr %s26, 2
          %s377 = sadd.s32 %s27, %s376
          %s378 = smul.addr %s377, 128
          %s379 = scalar_lea.hbm %s2, %s378
          %s380 = sshll.u32 %s359, 4
          %s381 = int_to_ptr.vmem [resolvable:$true] %s380
          %386 = dma.vmem_to_hbm [thread:$0]  %s381, 256, %s379, %s356, 128, 128, 8
        $region32: #{tpu_custom_call.1} parent=27 // pred_fallthru
          _
        // Predicated region
        $region33: #{tpu_custom_call.1} parent=27 // pred_check
          %p387 = pneg %p131
        $region34: #{tpu_custom_call.1} parent=27 // pred_check_branch
          %389 = sbr.rel (%p387) target = $region36
        $region35: #{tpu_custom_call.1} parent=27 // pred_region
          %s391 = ssub.s32 256, 256
          %392 = vsyncadd %s361, %s391
          %s393 = smul.addr %s26, 2
          %s394 = sadd.s32 %s27, %s393
          %s395 = smul.addr %s394, 128
          %s396 = scalar_lea.hbm %s3, %s395
          %s397 = sshll.u32 %s364, 4
          %s398 = int_to_ptr.vmem [resolvable:$true] %s397
          %403 = dma.vmem_to_hbm [thread:$0]  %s398, 256, %s396, %s361, 128, 128, 8
        $region36: #{tpu_custom_call.1} parent=27 // pred_fallthru
          _
        // Predicated region
        $region37: #{tpu_custom_call.1} parent=27 // pred_check
          %p404 = pneg %p159
        $region38: #{tpu_custom_call.1} parent=27 // pred_check_branch
          %406 = sbr.rel (%p404) target = $region40
        $region39: #{tpu_custom_call.1} parent=27 // pred_region
          %s408 = ssub.s32 256, 256
          %409 = vsyncadd %s366, %s408
          %s410 = smul.addr %s26, 2
          %s411 = sadd.s32 %s27, %s410
          %s412 = smul.addr %s411, 128
          %s413 = scalar_lea.hbm %s4, %s412
          %s414 = sshll.u32 %s369, 4
          %s415 = int_to_ptr.vmem [resolvable:$true] %s414
          %420 = dma.vmem_to_hbm [thread:$0]  %s415, 256, %s413, %s366, 128, 128, 8
        $region40: #{tpu_custom_call.1} parent=27 // pred_fallthru
          _
      $region28: #{tpu_custom_call.1} parent=5 // pred_fallthru
        _
      %p421 = scmp.le.s32.totalorder 2, %s17
      // Predicated region
      $region41: #{tpu_custom_call.1} parent=5 // pred_check
        %p422 = pneg %p421
      $region42: #{tpu_custom_call.1} parent=5 // pred_check_branch
        %424 = sbr.rel (%p422) target = $region44
      $region43: #{tpu_custom_call.1} parent=5 // pred_region
        %s425 = ssub.s32 %s17, 2
        // Predicated region
        $region45: #{tpu_custom_call.1} parent=43 // pred_check
          %p426 = pneg %p109
        $region46: #{tpu_custom_call.1} parent=43 // pred_check_branch
          %428 = sbr.rel (%p426) target = $region48
        $region47: #{tpu_custom_call.1} parent=43 // pred_region
          %s429 = sand.u32 %s94, 1
          %s430 = scalar_lea.sflag [#allocation3], %s429
          %s431 = sand.u32 %s94, 1
          %s432 = smul.addr %s431, 16
          %s433 = scalar_lea.vmem [#allocation2], %s432
          %434 = dma.done %s430, 256
        $region48: #{tpu_custom_call.1} parent=43 // pred_fallthru
          _
        // Predicated region
        $region49: #{tpu_custom_call.1} parent=43 // pred_check
          %p435 = pneg %p137
        $region50: #{tpu_custom_call.1} parent=43 // pred_check_branch
          %437 = sbr.rel (%p435) target = $region52
        $region51: #{tpu_custom_call.1} parent=43 // pred_region
          %s438 = sand.u32 %s23, 1
          %s439 = scalar_lea.sflag [#allocation5], %s438
          %s440 = sand.u32 %s122, 1
          %s441 = smul.addr %s440, 16
          %s442 = scalar_lea.vmem [#allocation4], %s441
          %443 = dma.done %s439, 256
        $region52: #{tpu_custom_call.1} parent=43 // pred_fallthru
          _
        // Predicated region
        $region53: #{tpu_custom_call.1} parent=43 // pred_check
          %p444 = pneg %p165
        $region54: #{tpu_custom_call.1} parent=43 // pred_check_branch
          %446 = sbr.rel (%p444) target = $region56
        $region55: #{tpu_custom_call.1} parent=43 // pred_region
          %s447 = sand.u32 %s23, 1
          %s448 = scalar_lea.sflag [#allocation5], %s447
          %s449 = sand.u32 %s150, 1
          %s450 = smul.addr %s449, 16
          %s451 = scalar_lea.vmem [#allocation6], %s450
          %452 = dma.done %s448, 256
        $region56: #{tpu_custom_call.1} parent=43 // pred_fallthru
          _
      $region44: #{tpu_custom_call.1} parent=5 // pred_fallthru
        _
    $region6: #{tpu_custom_call.1} parent=1 // loop_footer
      %s21 = sadd.s32 1, %s17
    $region7: #{tpu_custom_call.1} parent=1 // loop_footer_branch
      %16 = sbr.rel target = $region3
    $region8: #{tpu_custom_call.1} parent=1 // loop_exit
      _
    %453 = vsyncpa [#allocation3], 1
    %s454 = scalar_lea.sflag [#allocation3], 1
    %455 = vsyncpa %s454, 1
    %456 = vsyncpa [#allocation5], 1
    %s457 = scalar_lea.sflag [#allocation5], 1
    %458 = vsyncpa %s457, 1

</llo_original>
